<compile_context>
chip_gen: v7x
topology: tpu7x:2x2x1
jax: 0.10.0
libtpu: 0.0.40
codegen_flags: <defaults>
</compile_context>

<pallas_src>
import jax
import jax.numpy as jnp
from jax.experimental import pallas as pl
from jax.experimental.pallas import tpu as pltpu


def _scalar_kernel(const_ref, out_ref):
    # One scalar load + one scalar store in SMEM; no vector/DMA-tile traffic.
    out_ref[0] = const_ref[0]


@jax.jit
def scalar_forward_fused(constant: jax.Array) -> jax.Array:
    """Preferred path (per perf review): pure identity, zero ops after XLA
    simplification.  Use this — or pass the scalar straight into the consumer
    kernel as an SMEM / scalar-prefetch input — in real pipelines."""
    return constant.astype(jnp.float32)


@jax.jit
def scalar_forward(constant: jax.Array) -> jax.Array:
    """Pallas-kernel path (framework parity): returns the scalar parameter.

    `constant` is a 0-d float32 array (the nn.Parameter analogue). Returns a
    0-d float32 array.  input/output share the same (1,) buffer via
    input_output_aliases, so the only per-call cost is the custom-call launch
    plus one tiny HBM<->SMEM staging transfer.
    """
    const_1d = constant.astype(jnp.float32).reshape(1)
    out = pl.pallas_call(
        _scalar_kernel,
        out_shape=jax.ShapeDtypeStruct((1,), jnp.float32),
        in_specs=[pl.BlockSpec(memory_space=pltpu.SMEM)],
        out_specs=pl.BlockSpec(memory_space=pltpu.SMEM),
        input_output_aliases={0: 0},
    )(const_1d)
    return out[0]


class ScalarPallas:
    """Mirror of the PyTorch Scalar module (deterministic init in-script)."""

    def __init__(self, init_value: float):
        # nn.Parameter(torch.tensor(init_value, dtype=torch.float32))
        self.constant = jnp.asarray(init_value, dtype=jnp.float32)

    def __call__(self) -> jax.Array:
        # Pallas kernel path (parity with the task spec).
        return scalar_forward(self.constant)

    def forward_fused(self) -> jax.Array:
        # Zero-overhead path recommended by the performance review.
        return scalar_forward_fused(self.constant)


if __name__ == "__main__":
    # Deterministic "example input": the init_value for the parameter.
    key = jax.random.PRNGKey(0)
    init_value = float(jax.random.normal(key, (), dtype=jnp.float32))

    module = ScalarPallas(init_value)

    # Pallas-kernel path, called twice to confirm the parameter buffer is
    # still usable after the aliased call (no user-visible donation).
    result = module()
    jax.block_until_ready(result)
    result2 = module()
    jax.block_until_ready(result2)

    # Zero-op fused path (the recommended production path) must agree.
    fused = module.forward_fused()
    jax.block_until_ready(fused)

    assert result.shape == ()          # 0-d scalar, like torch.Size([])
    assert result.dtype == jnp.float32
    assert jnp.allclose(result, jnp.float32(init_value))
    assert jnp.allclose(result2, jnp.float32(init_value))
    assert jnp.allclose(fused, result)

    print("KERNEL_OK")
</pallas_src>

<mosaic_0001>
module attributes {stable_mosaic.version = 11 : i64} {
  func.func @_scalar_kernel(%arg0: memref<1xf32, #tpu.memory_space<smem>>, %arg1: memref<1xf32, #tpu.memory_space<smem>>) attributes {dimension_semantics = [], scalar_prefetch = 0 : i64, scratch_operands = 0 : i64, tpu.core_type = #tpu.core_type<tc>} {
    %c0 = arith.constant 0 : index
    %0 = memref.load %arg0[%c0] : memref<1xf32, #tpu.memory_space<smem>>
    %c0_0 = arith.constant 0 : index
    %1 = memref.load %arg1[%c0_0] : memref<1xf32, #tpu.memory_space<smem>>
    memref.store %0, %arg1[%c0_0] : memref<1xf32, #tpu.memory_space<smem>>
    return
  }
}

</mosaic_0001>

<llo_original>
// kernel: scalar_forward.1
$region0: #{scalar_forward.1}
  #allocation0 [shape = 'u32[]', space=smem, size = 0x4, offset = 0x4, fixed_abs, tag = 'smem constant byte address 0x4 - core index']
  #allocation1 [shape = 'u32[144,128]{1,0:T(1,128)}', space=vmem, size = 0x12000, scoped, tag = 'internal scratch']
  #allocation2 [shape = 'f32[1]{0:T(128)S(6)}', space=smem, size = 0x200, scoped, tag = 'scoped memory for scalar_forward.1']
  %s0 = inlined_call_operand.<no memory space> [shape: f32[1], index: 0, kind: input, shape index: {}, may-alias: {0,1}]
  %s1 = inlined_call_operand.hbm [shape: f32[1], index: 1, kind: output, shape index: {}, may-alias: {0,1}]
  %s2 = sld [smem:[#allocation0]]
  $region14: #{scalar_forward.1} parent=0
    _
  %s4 = ssub.s32 1, %s2
  %s5 = scalar_select 0, %s4, %s2
  %6 = sst [smem:[#allocation2]] %s0
  $region1: #{scalar_forward.1} parent=0
    #allocation3 [shape = 'u8[512]{0}', space=smem, size = 0x200, scoped, tag = 'output window, operand 0, single buffered']
    #allocation4 [shape = 's32[1]{0}', space=sflag, size = 0x4, scoped, tag = 'scoped memory for scalar_forward.1']
    %7 = vsyncpa [#allocation4], 0
    // Predicated region
    $region2: #{scalar_forward.1} parent=1 // pred_check
      _
    $region3: #{scalar_forward.1} parent=1 // pred_check_branch
      %9 = sbr.rel (0) target = $region5
    $region4: #{scalar_forward.1} parent=1 // pred_region
      _
    $region5: #{scalar_forward.1} parent=1 // pred_fallthru
      _
    %s10 = sld [smem:[#allocation2]]
    %s11 = scalar_lea.smem [#allocation3], 0
    %12 = sst [smem:[%s11]] %s10
    // Predicated region
    $region6: #{scalar_forward.1} parent=1 // pred_check
      _
    $region7: #{scalar_forward.1} parent=1 // pred_check_branch
      %14 = sbr.rel (0) target = $region9
    $region8: #{scalar_forward.1} parent=1 // pred_region
      %s16 = ssub.s32 16, 16
      %17 = vsyncadd [#allocation4], %s16
      %20 = dma.smem_to_hbm [#allocation3], 16, %s1, [#allocation4]
    $region9: #{scalar_forward.1} parent=1 // pred_fallthru
      _
    // Predicated region
    $region10: #{scalar_forward.1} parent=1 // pred_check
      _
    $region11: #{scalar_forward.1} parent=1 // pred_check_branch
      %22 = sbr.rel (0) target = $region13
    $region12: #{scalar_forward.1} parent=1 // pred_region
      %23 = dma.done [#allocation4], 16
    $region13: #{scalar_forward.1} parent=1 // pred_fallthru
      _
    %24 = sfence
    %25 = vsyncpa [#allocation4], 1

</llo_original>
